<compile_context>
chip_gen: v7x
topology: tpu7x:2x2x1
jax: 0.10.0
libtpu: 0.0.40
codegen_flags: <defaults>
</compile_context>

<pallas_src>
import functools

import jax
import jax.numpy as jnp
from jax import lax
from jax.experimental import pallas as pl
from jax.experimental.pallas import tpu as pltpu

HIDDEN1 = 512
HIDDEN2 = 128


def _mlp_kernel(x_ref, w1_ref, b1_ref, w2_ref, b2_ref, w3_ref, b3_ref, o_ref):
    # Load the f32 batch tile and cast to bf16 in-kernel (avoids a wrapper-side HBM
    # pass over x; the VPU cast hides under the MXU matmuls).
    x = x_ref[...].astype(jnp.bfloat16)                                # [TB, D]

    # Layer 1: Linear(D, 512) + ReLU   (bf16 MXU operands, f32 accumulate)
    h1 = jnp.dot(x, w1_ref[...], preferred_element_type=jnp.float32) + b1_ref[...]
    h1 = jnp.maximum(h1, 0.0)

    # Dropout(0.2): identity in eval-mode forward (matches PyTorch inference).
    # TODO(synk): training-mode dropout (pltpu.prng_seed/prng_random_bits mask + 1/0.8 scale).

    # Layer 2: Linear(512, 128) + ReLU
    h2 = jnp.dot(h1.astype(jnp.bfloat16), w2_ref[...],
                 preferred_element_type=jnp.float32) + b2_ref[...]
    h2 = jnp.maximum(h2, 0.0)

    # Layer 3: Linear(128, 1), computed as w3 (1,128) contracted against h2's feature
    # axis -> (1, TB).  Batch lands in the lane axis, so the store below is a
    # lane-dense unmasked vst instead of TB/8 masked single-lane stores.
    out_row = lax.dot_general(w3_ref[...], h2,
                              dimension_numbers=(((1,), (1,)), ((), ())),
                              preferred_element_type=jnp.float32) + b3_ref[0, 0]
    o_ref[...] = out_row.astype(o_ref.dtype)


def _round_up(n, m):
    return ((n + m - 1) // m) * m


def _chip_config():
    """Per-generation VMEM budgeting and megacore policy (trace-time query)."""
    try:
        kind = jax.devices()[0].device_kind.lower()
    except Exception:
        kind = ""
    if "v7" in kind or "7x" in kind:
        # 64 MiB physical VMEM per TensorCore (32 MiB default scoped), 2 TCs/chip.
        return {"vmem_budget": 36 << 20, "vmem_limit": 48 << 20, "two_cores": True}
    if "v6" in kind or "v5" in kind or "v4" in kind:
        # 128 MiB physical VMEM; raise the 16/32 MiB default scoped limit.
        return {"vmem_budget": 64 << 20, "vmem_limit": 96 << 20, "two_cores": False}
    # Unknown chip: stay under typical default scoped limits.
    return {"vmem_budget": 12 << 20, "vmem_limit": None, "two_cores": False}


def _pick_batch_tile(B, D, x_itemsize, block_b, vmem_budget):
    """Largest batch tile (multiple of 128) whose working set fits the VMEM budget."""
    per_row = (2 * D * x_itemsize          # x tile, double-buffered
               + HIDDEN1 * 4               # h1 (f32)
               + HIDDEN1 * 2               # h1 bf16 copy fed to the layer-2 MXU
               + HIDDEN2 * 4               # h2 (f32)
               + 2 * 4)                    # output row, double-buffered
    fixed = (2 * 2 * (D * HIDDEN1 + HIDDEN1 * HIDDEN2)   # bf16 weights (double-buffered)
             + 4 * (HIDDEN1 + 2 * HIDDEN2)               # f32 biases + w3 row
             + (2 << 20))                                # Mosaic internal scratch slack
    tb = (vmem_budget - fixed) // per_row
    tb = min(tb, block_b, _round_up(B, 128))
    return max(128, (tb // 128) * 128)


@functools.partial(jax.jit, static_argnames=("block_b",))
def grapharma_forward(x, params, *, block_b=4096):
    w1, b1, w2, b2, w3, b3 = params
    B, D = x.shape
    cfg = _chip_config()

    TB = _pick_batch_tile(B, D, x.dtype.itemsize, block_b, cfg["vmem_budget"])
    Bp = _round_up(B, TB)
    num_tiles = Bp // TB

    # Pad the batch only when it is not already a multiple of TB (no copy in the
    # common aligned-B case).  The padded rows produce finite values that land in the
    # sliced-off tail of the output.
    # TODO(synk): mask the ragged tail tile in-kernel to avoid this copy entirely.
    xp = x if Bp == B else jnp.pad(x, ((0, Bp - B), (0, 0)))

    # Weights cast/reshaped once per call (tiny).  bf16 MXU operands, f32 elsewhere.
    w1c = w1.astype(jnp.bfloat16)                             # (D, 512)
    w2c = w2.astype(jnp.bfloat16)                             # (512, 128)
    b1f = b1.reshape(1, HIDDEN1).astype(jnp.float32)          # (1, 512)
    b2f = b2.reshape(1, HIDDEN2).astype(jnp.float32)          # (1, 128)
    w3_row = w3.reshape(1, HIDDEN2).astype(jnp.float32)       # (1, 128)
    b3s = b3.reshape(1, 1).astype(jnp.float32)                # scalar -> SMEM

    # v7x: shard the batch grid across both TensorCores; elsewhere plain "parallel".
    if cfg["two_cores"] and num_tiles >= 2:
        dim_semantics = (pltpu.CORE_PARALLEL,)
    else:
        dim_semantics = ("parallel",)

    flops = 2 * Bp * (D * HIDDEN1 + HIDDEN1 * HIDDEN2 + HIDDEN2)
    bytes_accessed = (
        xp.size * xp.dtype.itemsize                    # x tiles
        + (w1c.size + w2c.size) * 2                    # resident bf16 weights
        + (b1f.size + b2f.size + w3_row.size + 1) * 4  # f32 biases + w3 row + b3
        + Bp * 4                                       # lane-dense f32 output
    )

    # NOTE: constant-index weight blocks are still double-buffered by default;
    # pl.Buffered(1) on those specs would halve resident-weight VMEM for very large D.
    out = pl.pallas_call(
        _mlp_kernel,
        grid=(num_tiles,),
        out_shape=jax.ShapeDtypeStruct((1, Bp), jnp.float32),
        in_specs=[
            pl.BlockSpec((TB, D), lambda i: (i, 0)),             # x tile (pipelined)
            pl.BlockSpec(w1c.shape, lambda i: (0, 0)),           # W1 resident
            pl.BlockSpec(b1f.shape, lambda i: (0, 0)),           # b1 resident
            pl.BlockSpec(w2c.shape, lambda i: (0, 0)),           # W2 resident
            pl.BlockSpec(b2f.shape, lambda i: (0, 0)),           # b2 resident
            pl.BlockSpec(w3_row.shape, lambda i: (0, 0)),        # w3 row resident
            pl.BlockSpec(memory_space=pltpu.MemorySpace.SMEM),   # b3 scalar in SMEM
        ],
        out_specs=pl.BlockSpec((1, TB), lambda i: (0, i)),       # lane-dense output row
        compiler_params=pltpu.CompilerParams(
            dimension_semantics=dim_semantics,
            vmem_limit_bytes=cfg["vmem_limit"]),
        cost_estimate=pl.CostEstimate(
            flops=flops, transcendentals=0, bytes_accessed=bytes_accessed),
    )(xp, w1c, b1f, w2c, b2f, w3_row, b3s)

    return out[0, :B].reshape(B, 1).astype(x.dtype)


def init_params(key, input_dim):
    """Deterministic init mirroring PyTorch nn.Linear default:
    W, b ~ U(-1/sqrt(fan_in), 1/sqrt(fan_in)); weights stored transposed as [in, out]."""
    dims = [(input_dim, HIDDEN1), (HIDDEN1, HIDDEN2), (HIDDEN2, 1)]
    params = []
    for (fan_in, fan_out) in dims:
        key, kw, kb = jax.random.split(key, 3)
        bound = 1.0 / jnp.sqrt(jnp.float32(fan_in))
        w = jax.random.uniform(kw, (fan_in, fan_out), jnp.float32, -bound, bound)
        b = jax.random.uniform(kb, (1, fan_out), jnp.float32, -bound, bound)
        params += [w, b]
    return tuple(params)


def _reference_forward(x, params):
    """Pure-JAX reference with the same bf16-operand / f32-accumulate recipe."""
    w1, b1, w2, b2, w3, b3 = params
    xb = x.astype(jnp.bfloat16)
    h1 = jnp.dot(xb, w1.astype(jnp.bfloat16),
                 preferred_element_type=jnp.float32) + b1
    h1 = jnp.maximum(h1, 0.0)
    h2 = jnp.dot(h1.astype(jnp.bfloat16), w2.astype(jnp.bfloat16),
                 preferred_element_type=jnp.float32) + b2
    h2 = jnp.maximum(h2, 0.0)
    return h2 @ w3 + b3


if __name__ == "__main__":
    key = jax.random.PRNGKey(0)
    k_x, k_p, k_x2 = jax.random.split(key, 3)

    batch, input_dim = 8, 32
    x = jax.random.normal(k_x, (batch, input_dim), jnp.float32)
    params = init_params(k_p, input_dim)

    out = jax.block_until_ready(grapharma_forward(x, params))
    ref = _reference_forward(x, params)
    assert out.shape == (batch, 1)
    assert jnp.allclose(out, ref, atol=1e-2, rtol=1e-2), (
        f"max abs err = {jnp.max(jnp.abs(out - ref))}")

    # Multi-tile + ragged-batch path: 300 rows, forced TB=128 -> grid of 3 tiles.
    x2 = jax.random.normal(k_x2, (300, input_dim), jnp.float32)
    out2 = jax.block_until_ready(grapharma_forward(x2, params, block_b=128))
    ref2 = _reference_forward(x2, params)
    assert out2.shape == (300, 1)
    assert jnp.allclose(out2, ref2, atol=1e-2, rtol=1e-2), (
        f"max abs err = {jnp.max(jnp.abs(out2 - ref2))}")

    print("KERNEL_OK")
</pallas_src>

<mosaic_0001>
module attributes {stable_mosaic.version = 11 : i64} {
  func.func @_mlp_kernel(%arg0: i32, %arg1: memref<128x32xf32, #tpu.memory_space<vmem>>, %arg2: memref<32x512xbf16, #tpu.memory_space<vmem>>, %arg3: memref<1x512xf32, #tpu.memory_space<vmem>>, %arg4: memref<512x128xbf16, #tpu.memory_space<vmem>>, %arg5: memref<1x128xf32, #tpu.memory_space<vmem>>, %arg6: memref<1x128xf32, #tpu.memory_space<vmem>>, %arg7: memref<1x1xf32, #tpu.memory_space<smem>>, %arg8: memref<1x128xf32, #tpu.memory_space<vmem>>) attributes {dimension_semantics = [#tpu.dimension_semantics<parallel>], iteration_bounds = array<i64: 1>, scalar_prefetch = 0 : i64, scratch_operands = 0 : i64, tpu.core_type = #tpu.core_type<tc>, window_params = [{transform_indices = @transform_0, window_bounds = array<i64: 128, 32>}, {pipeline_mode = #tpu.pipeline_mode<synchronous>, transform_indices = @transform_1, window_bounds = array<i64: 32, 512>}, {pipeline_mode = #tpu.pipeline_mode<synchronous>, transform_indices = @transform_2, window_bounds = array<i64: 1, 512>}, {pipeline_mode = #tpu.pipeline_mode<synchronous>, transform_indices = @transform_3, window_bounds = array<i64: 512, 128>}, {pipeline_mode = #tpu.pipeline_mode<synchronous>, transform_indices = @transform_4, window_bounds = array<i64: 1, 128>}, {pipeline_mode = #tpu.pipeline_mode<synchronous>, transform_indices = @transform_5, window_bounds = array<i64: 1, 128>}, {transform_indices = @transform_6, window_bounds = array<i64: 1, 1>}, {transform_indices = @transform_7, window_bounds = array<i64: 1, 128>}]} {
    %c0 = arith.constant 0 : index
    %c0_0 = arith.constant 0 : index
    %0 = vector.load %arg1[%c0, %c0_0] : memref<128x32xf32, #tpu.memory_space<vmem>>, vector<128x32xf32>
    %1 = arith.truncf %0 : vector<128x32xf32> to vector<128x32xbf16>
    %c0_1 = arith.constant 0 : index
    %c0_2 = arith.constant 0 : index
    %2 = vector.load %arg2[%c0_1, %c0_2] : memref<32x512xbf16, #tpu.memory_space<vmem>>, vector<32x512xbf16>
    %cst = arith.constant dense<0.000000e+00> : vector<128x512xf32>
    %3 = tpu.matmul %1, %2, %cst {dimension_numbers = #tpu.dot_dimension_numbers<[1], [0], [0], [1], [0, 0, 1, 1], [], []>} : vector<128x32xbf16>, vector<32x512xbf16>, vector<128x512xf32> -> vector<128x512xf32>
    %c0_3 = arith.constant 0 : index
    %c0_4 = arith.constant 0 : index
    %4 = vector.load %arg3[%c0_3, %c0_4] : memref<1x512xf32, #tpu.memory_space<vmem>>, vector<1x512xf32>
    %5 = vector.broadcast %4 : vector<1x512xf32> to vector<128x512xf32>
    %6 = arith.addf %3, %5 : vector<128x512xf32>
    %cst_5 = arith.constant 0.000000e+00 : f32
    %7 = vector.broadcast %cst_5 : f32 to vector<128x512xf32>
    %8 = arith.maximumf %6, %7 : vector<128x512xf32>
    %9 = arith.truncf %8 : vector<128x512xf32> to vector<128x512xbf16>
    %c0_6 = arith.constant 0 : index
    %c0_7 = arith.constant 0 : index
    %10 = vector.load %arg4[%c0_6, %c0_7] : memref<512x128xbf16, #tpu.memory_space<vmem>>, vector<512x128xbf16>
    %cst_8 = arith.constant dense<0.000000e+00> : vector<128x128xf32>
    %11 = tpu.matmul %9, %10, %cst_8 {dimension_numbers = #tpu.dot_dimension_numbers<[1], [0], [0], [1], [0, 0, 1, 1], [], []>} : vector<128x512xbf16>, vector<512x128xbf16>, vector<128x128xf32> -> vector<128x128xf32>
    %c0_9 = arith.constant 0 : index
    %c0_10 = arith.constant 0 : index
    %12 = vector.load %arg5[%c0_9, %c0_10] : memref<1x128xf32, #tpu.memory_space<vmem>>, vector<1x128xf32>
    %13 = vector.broadcast %12 : vector<1x128xf32> to vector<128x128xf32>
    %14 = arith.addf %11, %13 : vector<128x128xf32>
    %cst_11 = arith.constant 0.000000e+00 : f32
    %15 = vector.broadcast %cst_11 : f32 to vector<128x128xf32>
    %16 = arith.maximumf %14, %15 : vector<128x128xf32>
    %c0_12 = arith.constant 0 : index
    %c0_13 = arith.constant 0 : index
    %17 = vector.load %arg6[%c0_12, %c0_13] : memref<1x128xf32, #tpu.memory_space<vmem>>, vector<1x128xf32>
    %cst_14 = arith.constant dense<0.000000e+00> : vector<1x128xf32>
    %18 = tpu.matmul %17, %16, %cst_14 {dimension_numbers = #tpu.dot_dimension_numbers<[1], [1], [0], [0], [0, 0, 1, 0], [], []>} : vector<1x128xf32>, vector<128x128xf32>, vector<1x128xf32> -> vector<1x128xf32>
    %c0_15 = arith.constant 0 : index
    %c0_16 = arith.constant 0 : index
    %19 = memref.load %arg7[%c0_15, %c0_16] : memref<1x1xf32, #tpu.memory_space<smem>>
    %20 = vector.broadcast %19 : f32 to vector<1x128xf32>
    %21 = arith.addf %18, %20 : vector<1x128xf32>
    %c0_17 = arith.constant 0 : index
    %c0_18 = arith.constant 0 : index
    %22 = vector.load %arg8[%c0_17, %c0_18] : memref<1x128xf32, #tpu.memory_space<vmem>>, vector<1x128xf32>
    tpu.vector_store %arg8[%c0_17, %c0_18], %21 {strides = array<i32>} : memref<1x128xf32, #tpu.memory_space<vmem>>, vector<1x128xf32>,
    return
  }
  func.func @transform_0(%arg0: i32) -> (i32, i32) {
    %c0_i32 = arith.constant 0 : i32
    %c0_i32_0 = arith.constant 0 : i32
    return %arg0, %c0_i32 : i32, i32
  }
  func.func @transform_1(%arg0: i32) -> (i32, i32) {
    %c0_i32 = arith.constant 0 : i32
    %c0_i32_0 = arith.constant 0 : i32
    %c0_i32_1 = arith.constant 0 : i32
    return %c0_i32, %c0_i32_0 : i32, i32
  }
  func.func @transform_2(%arg0: i32) -> (i32, i32) {
    %c0_i32 = arith.constant 0 : i32
    %c0_i32_0 = arith.constant 0 : i32
    %c0_i32_1 = arith.constant 0 : i32
    return %c0_i32, %c0_i32_0 : i32, i32
  }
  func.func @transform_3(%arg0: i32) -> (i32, i32) {
    %c0_i32 = arith.constant 0 : i32
    %c0_i32_0 = arith.constant 0 : i32
    %c0_i32_1 = arith.constant 0 : i32
    return %c0_i32, %c0_i32_0 : i32, i32
  }
  func.func @transform_4(%arg0: i32) -> (i32, i32) {
    %c0_i32 = arith.constant 0 : i32
    %c0_i32_0 = arith.constant 0 : i32
    %c0_i32_1 = arith.constant 0 : i32
    return %c0_i32, %c0_i32_0 : i32, i32
  }
  func.func @transform_5(%arg0: i32) -> (i32, i32) {
    %c0_i32 = arith.constant 0 : i32
    %c0_i32_0 = arith.constant 0 : i32
    %c0_i32_1 = arith.constant 0 : i32
    return %c0_i32, %c0_i32_0 : i32, i32
  }
  func.func @transform_6(%arg0: i32) -> (i32, i32) {
    %c0_i32 = arith.constant 0 : i32
    %c0_i32_0 = arith.constant 0 : i32
    %c0_i32_1 = arith.constant 0 : i32
    return %c0_i32, %c0_i32_0 : i32, i32
  }
  func.func @transform_7(%arg0: i32) -> (i32, i32) {
    %c0_i32 = arith.constant 0 : i32
    %c0_i32_0 = arith.constant 0 : i32
    return %c0_i32, %arg0 : i32, i32
  }
}

</mosaic_0001>

<llo_original>
// kernel: grapharma_forward.1
$region0: #{grapharma_forward.1}
  #allocation0 [shape = 'u32[]', space=smem, size = 0x4, offset = 0x4, fixed_abs, tag = 'smem constant byte address 0x4 - core index']
  #allocation1 [shape = 'u32[144,128]{1,0:T(1,128)}', space=vmem, size = 0x12000, scoped, tag = 'internal scratch']
  #allocation2 [shape = 'f32[1,1]{1,0:T(1,128)S(6)}', space=smem, size = 0x200, scoped, tag = 'scoped memory for grapharma_forward.1']
  %s0 = inlined_call_operand.vmem [shape: f32[128,32], index: 0, kind: input, shape index: {}]
  %s1 = inlined_call_operand.vmem [shape: bf16[32,512], index: 1, kind: input, shape index: {}]
  %s2 = inlined_call_operand.vmem [shape: f32[1,512], index: 2, kind: input, shape index: {}]
  %s3 = inlined_call_operand.vmem [shape: bf16[512,128], index: 3, kind: input, shape index: {}]
  %s4 = inlined_call_operand.vmem [shape: f32[1,128], index: 4, kind: input, shape index: {}]
  %s5 = inlined_call_operand.vmem [shape: f32[1,128], index: 5, kind: input, shape index: {}]
  %s6 = inlined_call_operand.<no memory space> [shape: f32[1,1], index: 6, kind: input, shape index: {}]
  %s7 = inlined_call_operand.vmem [shape: f32[1,128], index: 7, kind: output, shape index: {}]
  %s8 = sld [smem:[#allocation0]]
  $region38: #{grapharma_forward.1} parent=0
    _
  %s10 = ssub.s32 1, %s8
  %s11 = scalar_select 0, %s10, %s8
  %12 = sst [smem:[#allocation2]] %s6
  // Predicated region
  $region2: #{grapharma_forward.1} parent=0 // pred_check
    _
  $region3: #{grapharma_forward.1} parent=0 // pred_check_branch
    %14 = sbr.rel (0) target = $region5
  $region4: #{grapharma_forward.1} parent=0 // pred_region
    _
  $region5: #{grapharma_forward.1} parent=0 // pred_fallthru
    _
  // Predicated region
  $region6: #{grapharma_forward.1} parent=0 // pred_check
    _
  $region7: #{grapharma_forward.1} parent=0 // pred_check_branch
    %16 = sbr.rel (0) target = $region9
  $region8: #{grapharma_forward.1} parent=0 // pred_region
    _
  $region9: #{grapharma_forward.1} parent=0 // pred_fallthru
    _
  // Predicated region
  $region10: #{grapharma_forward.1} parent=0 // pred_check
    _
  $region11: #{grapharma_forward.1} parent=0 // pred_check_branch
    %18 = sbr.rel (0) target = $region13
  $region12: #{grapharma_forward.1} parent=0 // pred_region
    _
  $region13: #{grapharma_forward.1} parent=0 // pred_fallthru
    _
  // Predicated region
  $region14: #{grapharma_forward.1} parent=0 // pred_check
    _
  $region15: #{grapharma_forward.1} parent=0 // pred_check_branch
    %20 = sbr.rel (0) target = $region17
  $region16: #{grapharma_forward.1} parent=0 // pred_region
    _
  $region17: #{grapharma_forward.1} parent=0 // pred_fallthru
    _
  // Predicated region
  $region18: #{grapharma_forward.1} parent=0 // pred_check
    _
  $region19: #{grapharma_forward.1} parent=0 // pred_check_branch
    %22 = sbr.rel (0) target = $region21
  $region20: #{grapharma_forward.1} parent=0 // pred_region
    _
  $region21: #{grapharma_forward.1} parent=0 // pred_fallthru
    _
  // Predicated region
  $region22: #{grapharma_forward.1} parent=0 // pred_check
    _
  $region23: #{grapharma_forward.1} parent=0 // pred_check_branch
    %24 = sbr.rel (0) target = $region25
  $region24: #{grapharma_forward.1} parent=0 // pred_region
    _
  $region25: #{grapharma_forward.1} parent=0 // pred_fallthru
    _
  // Predicated region
  $region26: #{grapharma_forward.1} parent=0 // pred_check
    _
  $region27: #{grapharma_forward.1} parent=0 // pred_check_branch
    %26 = sbr.rel (0) target = $region29
  $region28: #{grapharma_forward.1} parent=0 // pred_region
    _
  $region29: #{grapharma_forward.1} parent=0 // pred_fallthru
    _
  %v28 = vld [vmem:[%s0] sm:$0xff]
  %v29 = vld [vmem:[%s0 + $0x8] sm:$0xff]
  %v30 = vld [vmem:[%s0 + $0x10] sm:$0xff]
  %v31 = vld [vmem:[%s0 + $0x18] sm:$0xff]
  %v32 = vld [vmem:[%s0 + $0x20] sm:$0xff]
  %v33 = vld [vmem:[%s0 + $0x28] sm:$0xff]
  %v34 = vld [vmem:[%s0 + $0x30] sm:$0xff]
  %v35 = vld [vmem:[%s0 + $0x38] sm:$0xff]
  %v36 = vld [vmem:[%s0 + $0x40] sm:$0xff]
  %v37 = vld [vmem:[%s0 + $0x48] sm:$0xff]
  %v38 = vld [vmem:[%s0 + $0x50] sm:$0xff]
  %v39 = vld [vmem:[%s0 + $0x58] sm:$0xff]
  %v40 = vld [vmem:[%s0 + $0x60] sm:$0xff]
  %v41 = vld [vmem:[%s0 + $0x68] sm:$0xff]
  %v42 = vld [vmem:[%s0 + $0x70] sm:$0xff]
  %v43 = vld [vmem:[%s0 + $0x78] sm:$0xff]
  %v44 = vpack.c.bf16 %v29, %v28
  %v45 = vpack.c.bf16 %v31, %v30
  %v46 = vpack.c.bf16 %v33, %v32
  %v47 = vpack.c.bf16 %v35, %v34
  %v48 = vpack.c.bf16 %v37, %v36
  %v49 = vpack.c.bf16 %v39, %v38
  %v50 = vpack.c.bf16 %v41, %v40
  %v51 = vpack.c.bf16 %v43, %v42
  %v52 = vld [vmem:[%s1] sm:$0xff]
  %v53 = vld [vmem:[%s1 + $0x8] sm:$0xff]
  %v54 = vld [vmem:[%s1 + $0x10] sm:$0xff]
  %v55 = vld [vmem:[%s1 + $0x18] sm:$0xff]
  %v56 = vld [vmem:[%s1 + $0x20] sm:$0xff]
  %v57 = vld [vmem:[%s1 + $0x28] sm:$0xff]
  %v58 = vld [vmem:[%s1 + $0x30] sm:$0xff]
  %v59 = vld [vmem:[%s1 + $0x38] sm:$0xff]
  %v60 = vld [vmem:[%s2] sm:$0xf]
  %v62 = vlaneseq
  %v63 = vshrl.u32 %v62, 7
  %v64 = vsub.s32 0, %v63
  %v65 = vrot.slane %v60, %v64
  %v66 = vlaneseq
  %v67 = vshrl.u32 %v66, 7
  %v68 = vsub.s32 1, %v67
  %v69 = vrot.slane %v60, %v68
  %v70 = vlaneseq
  %v71 = vshrl.u32 %v70, 7
  %v72 = vsub.s32 2, %v71
  %v73 = vrot.slane %v60, %v72
  %v74 = vlaneseq
  %v75 = vshrl.u32 %v74, 7
  %v76 = vsub.s32 3, %v75
  %v77 = vrot.slane %v60, %v76
  %v90 = vunpack.c.l.b16 %v52
  %v91 = vunpack.c.h.b16 %v52
  %v92 = vunpack.c.l.b16 %v53
  %v93 = vunpack.c.h.b16 %v53
  %v94 = vunpack.c.l.b16 %v54
  %v95 = vunpack.c.h.b16 %v54
  %v96 = vunpack.c.l.b16 %v55
  %v97 = vunpack.c.h.b16 %v55
  %v98 = vunpack.c.l.b16 %v56
  %v99 = vunpack.c.h.b16 %v56
  %v100 = vunpack.c.l.b16 %v57
  %v101 = vunpack.c.h.b16 %v57
  %v102 = vunpack.c.l.b16 %v58
  %v103 = vunpack.c.h.b16 %v58
  %v104 = vunpack.c.l.b16 %v59
  %v105 = vunpack.c.h.b16 %v59
  %v106 = vpack.c.b16 %v94, %v90
  %v107 = vpack.c.b16 %v95, %v91
  %v108 = vpack.c.b16 %v96, %v92
  %v109 = vpack.c.b16 %v97, %v93
  %v110 = vpack.c.b16 %v102, %v98
  %v111 = vpack.c.b16 %v103, %v99
  %v112 = vpack.c.b16 %v104, %v100
  %v113 = vpack.c.b16 %v105, %v101
  %vm122 = vcmask 261120
  %v124 = vsel %vm122, %v44, 0
  %v127 = vsel %vm122, %v45, 0
  %v130 = vsel %vm122, %v46, 0
  %v133 = vsel %vm122, %v47, 0
  %v136 = vsel %vm122, %v48, 0
  %v139 = vsel %vm122, %v49, 0
  %v142 = vsel %vm122, %v50, 0
  %v145 = vsel %vm122, %v51, 0
  %147 = vmatprep.subr.bf16.mxu0 %v107
  %148 = vmatpush1.bf16.msra.mxu0 %v106
  %149 = vmatprep.subr.bf16.mxu0 %v111
  %150 = vmatpush1.bf16.msra.mxu0 %v110
  %151 = vmatprep.subr.bf16.mxu0 0
  %152 = vmatpush1.bf16.msra.mxu0 0
  %153 = vmatprep.subr.bf16.mxu0 0
  %154 = vmatpush1.bf16.msra.mxu0 0
  %155 = vmatprep.subr.bf16.mxu0 0
  %156 = vmatpush1.bf16.msra.mxu0 0
  %157 = vmatprep.subr.bf16.mxu0 0
  %158 = vmatpush1.bf16.msra.mxu0 0
  %159 = vmatprep.subr.bf16.mxu0 0
  %160 = vmatpush1.bf16.msra.mxu0 0
  %161 = vmatprep.subr.bf16.mxu0 0
  %162 = vmatpush1.bf16.msra.mxu0 0
  %163 = vmatprep.subr.bf16.mxu0 0
  %164 = vmatpush1.bf16.msra.mxu0 0
  %165 = vmatprep.subr.bf16.mxu0 0
  %166 = vmatpush1.bf16.msra.mxu0 0
  %167 = vmatprep.subr.bf16.mxu0 0
  %168 = vmatpush1.bf16.msra.mxu0 0
  %169 = vmatprep.subr.bf16.mxu0 0
  %170 = vmatpush1.bf16.msra.mxu0 0
  %171 = vmatprep.subr.bf16.mxu0 0
  %172 = vmatpush1.bf16.msra.mxu0 0
  %173 = vmatprep.subr.bf16.mxu0 0
  %174 = vmatpush1.bf16.msra.mxu0 0
  %175 = vmatprep.subr.bf16.mxu0 0
  %176 = vmatpush1.bf16.msra.mxu0 0
  %177 = vmatprep.subr.bf16.mxu0 0
  %178 = vmatpush1.bf16.msra.mxu0 0
  %179 = vmatprep.mubr.bf16.mxu0 0
  %180 = vmatmul.mubr.bf16.gmra.mrb[0].mxu0 %v124
  %v181 = vpop.f32.mrb[0].mxu0
  %v182 = vadd.f32 %v65, %v181
  %v183 = vpop.f32.mrb[0].mxu0
  %v184 = vadd.f32 %v69, %v183
  %v185 = vpop.f32.mrb[0].mxu0
  %v186 = vadd.f32 %v65, %v185
  %v187 = vpop.f32.mrb[0].mxu0
  %v188 = vadd.f32 %v69, %v187
  %189 = vmatprep.mubr.bf16.mxu0 0
  %190 = vmatmul.mubr.bf16.gmra.mrb[0].mxu0 %v127
  %v191 = vpop.f32.mrb[0].mxu0
  %v192 = vadd.f32 %v65, %v191
  %v193 = vpop.f32.mrb[0].mxu0
  %v194 = vadd.f32 %v69, %v193
  %v195 = vpop.f32.mrb[0].mxu0
  %v196 = vadd.f32 %v65, %v195
  %v197 = vpop.f32.mrb[0].mxu0
  %v198 = vadd.f32 %v69, %v197
  %199 = vmatprep.mubr.bf16.mxu0 0
  %200 = vmatmul.mubr.bf16.gmra.mrb[0].mxu0 %v130
  %v201 = vpop.f32.mrb[0].mxu0
  %v202 = vadd.f32 %v65, %v201
  %v203 = vpop.f32.mrb[0].mxu0
  %v204 = vadd.f32 %v69, %v203
  %v205 = vpop.f32.mrb[0].mxu0
  %v206 = vadd.f32 %v65, %v205
  %v207 = vpop.f32.mrb[0].mxu0
  %v208 = vadd.f32 %v69, %v207
  %209 = vmatprep.mubr.bf16.mxu0 0
  %210 = vmatmul.mubr.bf16.gmra.mrb[0].mxu0 %v133
  %v211 = vpop.f32.mrb[0].mxu0
  %v212 = vadd.f32 %v65, %v211
  %v213 = vpop.f32.mrb[0].mxu0
  %v214 = vadd.f32 %v69, %v213
  %v215 = vpop.f32.mrb[0].mxu0
  %v216 = vadd.f32 %v65, %v215
  %v217 = vpop.f32.mrb[0].mxu0
  %v218 = vadd.f32 %v69, %v217
  %219 = vmatprep.mubr.bf16.mxu0 0
  %220 = vmatmul.mubr.bf16.gmra.mrb[0].mxu0 %v136
  %v221 = vpop.f32.mrb[0].mxu0
  %v222 = vadd.f32 %v65, %v221
  %v223 = vpop.f32.mrb[0].mxu0
  %v224 = vadd.f32 %v69, %v223
  %v225 = vpop.f32.mrb[0].mxu0
  %v226 = vadd.f32 %v65, %v225
  %v227 = vpop.f32.mrb[0].mxu0
  %v228 = vadd.f32 %v69, %v227
  %229 = vmatprep.mubr.bf16.mxu0 0
  %230 = vmatmul.mubr.bf16.gmra.mrb[0].mxu0 %v139
  %v231 = vpop.f32.mrb[0].mxu0
  %v232 = vadd.f32 %v65, %v231
  %v233 = vpop.f32.mrb[0].mxu0
  %v234 = vadd.f32 %v69, %v233
  %v235 = vpop.f32.mrb[0].mxu0
  %v236 = vadd.f32 %v65, %v235
  %v237 = vpop.f32.mrb[0].mxu0
  %v238 = vadd.f32 %v69, %v237
  %239 = vmatprep.mubr.bf16.mxu0 0
  %240 = vmatmul.mubr.bf16.gmra.mrb[0].mxu0 %v142
  %v241 = vpop.f32.mrb[0].mxu0
  %v242 = vadd.f32 %v65, %v241
  %v243 = vpop.f32.mrb[0].mxu0
  %v244 = vadd.f32 %v69, %v243
  %v245 = vpop.f32.mrb[0].mxu0
  %v246 = vadd.f32 %v65, %v245
  %v247 = vpop.f32.mrb[0].mxu0
  %v248 = vadd.f32 %v69, %v247
  %249 = vmatprep.mubr.bf16.mxu0 0
  %250 = vmatmul.mubr.bf16.gmra.mrb[0].mxu0 %v145
  %v251 = vpop.f32.mrb[0].mxu0
  %v252 = vadd.f32 %v65, %v251
  %v253 = vpop.f32.mrb[0].mxu0
  %v254 = vadd.f32 %v69, %v253
  %v255 = vpop.f32.mrb[0].mxu0
  %v256 = vadd.f32 %v65, %v255
  %v257 = vpop.f32.mrb[0].mxu0
  %v258 = vadd.f32 %v69, %v257
  %259 = vdwg.mxu0
  %260 = vmatprep.subr.bf16.mxu0 %v109
  %261 = vmatpush1.bf16.msra.mxu0 %v108
  %262 = vmatprep.subr.bf16.mxu0 %v113
  %263 = vmatpush1.bf16.msra.mxu0 %v112
  %264 = vmatprep.subr.bf16.mxu0 0
  %265 = vmatpush1.bf16.msra.mxu0 0
  %266 = vmatprep.subr.bf16.mxu0 0
  %267 = vmatpush1.bf16.msra.mxu0 0
  %268 = vmatprep.subr.bf16.mxu0 0
  %269 = vmatpush1.bf16.msra.mxu0 0
  %270 = vmatprep.subr.bf16.mxu0 0
  %271 = vmatpush1.bf16.msra.mxu0 0
  %272 = vmatprep.subr.bf16.mxu0 0
  %273 = vmatpush1.bf16.msra.mxu0 0
  %274 = vmatprep.subr.bf16.mxu0 0
  %275 = vmatpush1.bf16.msra.mxu0 0
  %276 = vmatprep.subr.bf16.mxu0 0
  %277 = vmatpush1.bf16.msra.mxu0 0
  %278 = vmatprep.subr.bf16.mxu0 0
  %279 = vmatpush1.bf16.msra.mxu0 0
  %280 = vmatprep.subr.bf16.mxu0 0
  %281 = vmatpush1.bf16.msra.mxu0 0
  %282 = vmatprep.subr.bf16.mxu0 0
  %283 = vmatpush1.bf16.msra.mxu0 0
  %284 = vmatprep.subr.bf16.mxu0 0
  %285 = vmatpush1.bf16.msra.mxu0 0
  %286 = vmatprep.subr.bf16.mxu0 0
  %287 = vmatpush1.bf16.msra.mxu0 0
  %288 = vmatprep.subr.bf16.mxu0 0
  %289 = vmatpush1.bf16.msra.mxu0 0
  %290 = vmatprep.subr.bf16.mxu0 0
  %291 = vmatpush1.bf16.msra.mxu0 0
  %292 = vmatprep.mubr.bf16.mxu0 0
  %293 = vmatmul.mubr.bf16.gmra.mrb[0].mxu0 %v124
  %v294 = vpop.f32.mrb[0].mxu0
  %v295 = vadd.f32 %v73, %v294
  %v296 = vpop.f32.mrb[0].mxu0
  %v297 = vadd.f32 %v77, %v296
  %v298 = vpop.f32.mrb[0].mxu0
  %v299 = vadd.f32 %v73, %v298
  %v300 = vpop.f32.mrb[0].mxu0
  %v301 = vadd.f32 %v77, %v300
  %302 = vmatprep.mubr.bf16.mxu0 0
  %303 = vmatmul.mubr.bf16.gmra.mrb[0].mxu0 %v127
  %v304 = vpop.f32.mrb[0].mxu0
  %v305 = vadd.f32 %v73, %v304
  %v306 = vpop.f32.mrb[0].mxu0
  %v307 = vadd.f32 %v77, %v306
  %v308 = vpop.f32.mrb[0].mxu0
  %v309 = vadd.f32 %v73, %v308
  %v310 = vpop.f32.mrb[0].mxu0
  %v311 = vadd.f32 %v77, %v310
  %312 = vmatprep.mubr.bf16.mxu0 0
  %313 = vmatmul.mubr.bf16.gmra.mrb[0].mxu0 %v130
  %v314 = vpop.f32.mrb[0].mxu0
  %v315 = vadd.f32 %v73, %v314
  %v316 = vpop.f32.mrb[0].mxu0
  %v317 = vadd.f32 %v77, %v316
  %v318 = vpop.f32.mrb[0].mxu0
  %v319 = vadd.f32 %v73, %v318
  %v320 = vpop.f32.mrb[0].mxu0
  %v321 = vadd.f32 %v77, %v320
  %322 = vmatprep.mubr.bf16.mxu0 0
  %323 = vmatmul.mubr.bf16.gmra.mrb[0].mxu0 %v133
  %v324 = vpop.f32.mrb[0].mxu0
  %v325 = vadd.f32 %v73, %v324
  %v326 = vpop.f32.mrb[0].mxu0
  %v327 = vadd.f32 %v77, %v326
  %v328 = vpop.f32.mrb[0].mxu0
  %v329 = vadd.f32 %v73, %v328
  %v330 = vpop.f32.mrb[0].mxu0
  %v331 = vadd.f32 %v77, %v330
  %332 = vmatprep.mubr.bf16.mxu0 0
  %333 = vmatmul.mubr.bf16.gmra.mrb[0].mxu0 %v136
  %v334 = vpop.f32.mrb[0].mxu0
  %v335 = vadd.f32 %v73, %v334
  %v336 = vpop.f32.mrb[0].mxu0
  %v337 = vadd.f32 %v77, %v336
  %v338 = vpop.f32.mrb[0].mxu0
  %v339 = vadd.f32 %v73, %v338
  %v340 = vpop.f32.mrb[0].mxu0
  %v341 = vadd.f32 %v77, %v340
  %342 = vmatprep.mubr.bf16.mxu0 0
  %343 = vmatmul.mubr.bf16.gmra.mrb[0].mxu0 %v139
  %v344 = vpop.f32.mrb[0].mxu0
  %v345 = vadd.f32 %v73, %v344
  %v346 = vpop.f32.mrb[0].mxu0
  %v347 = vadd.f32 %v77, %v346
  %v348 = vpop.f32.mrb[0].mxu0
  %v349 = vadd.f32 %v73, %v348
  %v350 = vpop.f32.mrb[0].mxu0
  %v351 = vadd.f32 %v77, %v350
  %352 = vmatprep.mubr.bf16.mxu0 0
  %353 = vmatmul.mubr.bf16.gmra.mrb[0].mxu0 %v142
  %v354 = vpop.f32.mrb[0].mxu0
  %v355 = vadd.f32 %v73, %v354
  %v356 = vpop.f32.mrb[0].mxu0
  %v357 = vadd.f32 %v77, %v356
  %v358 = vpop.f32.mrb[0].mxu0
  %v359 = vadd.f32 %v73, %v358
  %v360 = vpop.f32.mrb[0].mxu0
  %v361 = vadd.f32 %v77, %v360
  %362 = vmatprep.mubr.bf16.mxu0 0
  %363 = vmatmul.mubr.bf16.gmra.mrb[0].mxu0 %v145
  %v364 = vpop.f32.mrb[0].mxu0
  %v365 = vadd.f32 %v73, %v364
  %v366 = vpop.f32.mrb[0].mxu0
  %v367 = vadd.f32 %v77, %v366
  %v368 = vpop.f32.mrb[0].mxu0
  %v369 = vadd.f32 %v73, %v368
  %v370 = vpop.f32.mrb[0].mxu0
  %v371 = vadd.f32 %v77, %v370
  %372 = vdwg.mxu0
  %v373 = vmax.f32 %v182, 0.0
  %v374 = vmax.f32 %v184, 0.0
  %v375 = vmax.f32 %v295, 0.0
  %v376 = vmax.f32 %v297, 0.0
  %v377 = vmax.f32 %v186, 0.0
  %v378 = vmax.f32 %v188, 0.0
  %v379 = vmax.f32 %v299, 0.0
  %v380 = vmax.f32 %v301, 0.0
  %v381 = vmax.f32 %v192, 0.0
  %v382 = vmax.f32 %v194, 0.0
  %v383 = vmax.f32 %v305, 0.0
  %v384 = vmax.f32 %v307, 0.0
  %v385 = vmax.f32 %v196, 0.0
  %v386 = vmax.f32 %v198, 0.0
  %v387 = vmax.f32 %v309, 0.0
  %v388 = vmax.f32 %v311, 0.0
  %v389 = vmax.f32 %v202, 0.0
  %v390 = vmax.f32 %v204, 0.0
  %v391 = vmax.f32 %v315, 0.0
  %v392 = vmax.f32 %v317, 0.0
  %v393 = vmax.f32 %v206, 0.0
  %v394 = vmax.f32 %v208, 0.0
  %v395 = vmax.f32 %v319, 0.0
  %v396 = vmax.f32 %v321, 0.0
  %v397 = vmax.f32 %v212, 0.0
  %v398 = vmax.f32 %v214, 0.0
  %v399 = vmax.f32 %v325, 0.0
  %v400 = vmax.f32 %v327, 0.0
  %v401 = vmax.f32 %v216, 0.0
  %v402 = vmax.f32 %v218, 0.0
  %v403 = vmax.f32 %v329, 0.0
  %v404 = vmax.f32 %v331, 0.0
  %v405 = vmax.f32 %v222, 0.0
  %v406 = vmax.f32 %v224, 0.0
  %v407 = vmax.f32 %v335, 0.0
  %v408 = vmax.f32 %v337, 0.0
  %v409 = vmax.f32 %v226, 0.0
  %v410 = vmax.f32 %v228, 0.0
  %v411 = vmax.f32 %v339, 0.0
  %v412 = vmax.f32 %v341, 0.0
  %v413 = vmax.f32 %v232, 0.0
  %v414 = vmax.f32 %v234, 0.0
  %v415 = vmax.f32 %v345, 0.0
  %v416 = vmax.f32 %v347, 0.0
  %v417 = vmax.f32 %v236, 0.0
  %v418 = vmax.f32 %v238, 0.0
  %v419 = vmax.f32 %v349, 0.0
  %v420 = vmax.f32 %v351, 0.0
  %v421 = vmax.f32 %v242, 0.0
  %v422 = vmax.f32 %v244, 0.0
  %v423 = vmax.f32 %v355, 0.0
  %v424 = vmax.f32 %v357, 0.0
  %v425 = vmax.f32 %v246, 0.0
  %v426 = vmax.f32 %v248, 0.0
  %v427 = vmax.f32 %v359, 0.0
  %v428 = vmax.f32 %v361, 0.0
  %v429 = vmax.f32 %v252, 0.0
  %v430 = vmax.f32 %v254, 0.0
  %v431 = vmax.f32 %v365, 0.0
  %v432 = vmax.f32 %v367, 0.0
  %v433 = vmax.f32 %v256, 0.0
  %v434 = vmax.f32 %v258, 0.0
  %v435 = vmax.f32 %v369, 0.0
  %v436 = vmax.f32 %v371, 0.0
  %v437 = vpack.c.bf16 %v377, %v373
  %v438 = vpack.c.bf16 %v378, %v374
  %v439 = vpack.c.bf16 %v379, %v375
  %v440 = vpack.c.bf16 %v380, %v376
  %v441 = vpack.c.bf16 %v385, %v381
  %v442 = vpack.c.bf16 %v386, %v382
  %v443 = vpack.c.bf16 %v387, %v383
  %v444 = vpack.c.bf16 %v388, %v384
  %v445 = vpack.c.bf16 %v393, %v389
  %v446 = vpack.c.bf16 %v394, %v390
  %v447 = vpack.c.bf16 %v395, %v391
  %v448 = vpack.c.bf16 %v396, %v392
  %v449 = vpack.c.bf16 %v401, %v397
  %v450 = vpack.c.bf16 %v402, %v398
  %v451 = vpack.c.bf16 %v403, %v399
  %v452 = vpack.c.bf16 %v404, %v400
  %v453 = vpack.c.bf16 %v409, %v405
  %v454 = vpack.c.bf16 %v410, %v406
  %v455 = vpack.c.bf16 %v411, %v407
  %v456 = vpack.c.bf16 %v412, %v408
  %v457 = vpack.c.bf16 %v417, %v413
  %v458 = vpack.c.bf16 %v418, %v414
  %v459 = vpack.c.bf16 %v419, %v415
  %v460 = vpack.c.bf16 %v420, %v416
  %v461 = vpack.c.bf16 %v425, %v421
  %v462 = vpack.c.bf16 %v426, %v422
  %v463 = vpack.c.bf16 %v427, %v423
  %v464 = vpack.c.bf16 %v428, %v424
  %v465 = vpack.c.bf16 %v433, %v429
  %v466 = vpack.c.bf16 %v434, %v430
  %v467 = vpack.c.bf16 %v435, %v431
  %v468 = vpack.c.bf16 %v436, %v432
  %v469 = vld [vmem:[%s3] sm:$0xf]
  %v470 = vld [vmem:[%s3 + $0x4] sm:$0xf]
  %v471 = vld [vmem:[%s3 + $0x8] sm:$0xf]
  %v472 = vld [vmem:[%s3 + $0xc] sm:$0xf]
  %v473 = vld [vmem:[%s3 + $0x10] sm:$0xf]
  %v474 = vld [vmem:[%s3 + $0x14] sm:$0xf]
  %v475 = vld [vmem:[%s3 + $0x18] sm:$0xf]
  %v476 = vld [vmem:[%s3 + $0x1c] sm:$0xf]
  %v477 = vld [vmem:[%s3 + $0x20] sm:$0xf]
  %v478 = vld [vmem:[%s3 + $0x24] sm:$0xf]
  %v479 = vld [vmem:[%s3 + $0x28] sm:$0xf]
  %v480 = vld [vmem:[%s3 + $0x2c] sm:$0xf]
  %v481 = vld [vmem:[%s3 + $0x30] sm:$0xf]
  %v482 = vld [vmem:[%s3 + $0x34] sm:$0xf]
  %v483 = vld [vmem:[%s3 + $0x38] sm:$0xf]
  %v484 = vld [vmem:[%s3 + $0x3c] sm:$0xf]
  %v485 = vld [vmem:[%s3 + $0x40] sm:$0xf]
  %v486 = vld [vmem:[%s3 + $0x44] sm:$0xf]
  %v487 = vld [vmem:[%s3 + $0x48] sm:$0xf]
  %v488 = vld [vmem:[%s3 + $0x4c] sm:$0xf]
  %v489 = vld [vmem:[%s3 + $0x50] sm:$0xf]
  %v490 = vld [vmem:[%s3 + $0x54] sm:$0xf]
  %v491 = vld [vmem:[%s3 + $0x58] sm:$0xf]
  %v492 = vld [vmem:[%s3 + $0x5c] sm:$0xf]
  %v493 = vld [vmem:[%s3 + $0x60] sm:$0xf]
  %v494 = vld [vmem:[%s3 + $0x64] sm:$0xf]
  %v495 = vld [vmem:[%s3 + $0x68] sm:$0xf]
  %v496 = vld [vmem:[%s3 + $0x6c] sm:$0xf]
  %v497 = vld [vmem:[%s3 + $0x70] sm:$0xf]
  %v498 = vld [vmem:[%s3 + $0x74] sm:$0xf]
  %v499 = vld [vmem:[%s3 + $0x78] sm:$0xf]
  %v500 = vld [vmem:[%s3 + $0x7c] sm:$0xf]
  %v501 = vld [vmem:[%s3 + $0x80] sm:$0xf]
  %v502 = vld [vmem:[%s3 + $0x84] sm:$0xf]
  %v503 = vld [vmem:[%s3 + $0x88] sm:$0xf]
  %v504 = vld [vmem:[%s3 + $0x8c] sm:$0xf]
  %v505 = vld [vmem:[%s3 + $0x90] sm:$0xf]
  %v506 = vld [vmem:[%s3 + $0x94] sm:$0xf]
  %v507 = vld [vmem:[%s3 + $0x98] sm:$0xf]
  %v508 = vld [vmem:[%s3 + $0x9c] sm:$0xf]
  %v509 = vld [vmem:[%s3 + $0xa0] sm:$0xf]
  %v510 = vld [vmem:[%s3 + $0xa4] sm:$0xf]
  %v511 = vld [vmem:[%s3 + $0xa8] sm:$0xf]
  %v512 = vld [vmem:[%s3 + $0xac] sm:$0xf]
  %v513 = vld [vmem:[%s3 + $0xb0] sm:$0xf]
  %v514 = vld [vmem:[%s3 + $0xb4] sm:$0xf]
  %v515 = vld [vmem:[%s3 + $0xb8] sm:$0xf]
  %v516 = vld [vmem:[%s3 + $0xbc] sm:$0xf]
  %v517 = vld [vmem:[%s3 + $0xc0] sm:$0xf]
  %v518 = vld [vmem:[%s3 + $0xc4] sm:$0xf]
  %v519 = vld [vmem:[%s3 + $0xc8] sm:$0xf]
  %v520 = vld [vmem:[%s3 + $0xcc] sm:$0xf]
  %v521 = vld [vmem:[%s3 + $0xd0] sm:$0xf]
  %v522 = vld [vmem:[%s3 + $0xd4] sm:$0xf]
  %v523 = vld [vmem:[%s3 + $0xd8] sm:$0xf]
  %v524 = vld [vmem:[%s3 + $0xdc] sm:$0xf]
  %v525 = vld [vmem:[%s3 + $0xe0] sm:$0xf]
  %v526 = vld [vmem:[%s3 + $0xe4] sm:$0xf]
  %v527 = vld [vmem:[%s3 + $0xe8] sm:$0xf]
  %v528 = vld [vmem:[%s3 + $0xec] sm:$0xf]
  %v529 = vld [vmem:[%s3 + $0xf0] sm:$0xf]
  %v530 = vld [vmem:[%s3 + $0xf4] sm:$0xf]
  %v531 = vld [vmem:[%s3 + $0xf8] sm:$0xf]
  %v532 = vld [vmem:[%s3 + $0xfc] sm:$0xf]
  %v533 = vld [vmem:[%s4] sm:$0x1]
  %v535 = vlaneseq
  %v536 = vshrl.u32 %v535, 7
  %v537 = vsub.s32 0, %v536
  %v538 = vrot.slane %v533, %v537
  %v604 = vunpack.c.l.b16 %v469
  %v605 = vunpack.c.l.b16 %v470
  %v606 = vunpack.c.l.b16 %v471
  %v607 = vunpack.c.l.b16 %v472
  %v608 = vunpack.c.l.b16 %v473
  %v609 = vunpack.c.l.b16 %v474
  %v610 = vunpack.c.l.b16 %v475
  %v611 = vunpack.c.l.b16 %v476
  %v612 = vunpack.c.l.b16 %v477
  %v613 = vunpack.c.l.b16 %v478
  %v614 = vunpack.c.l.b16 %v479
  %v615 = vunpack.c.l.b16 %v480
  %v616 = vunpack.c.l.b16 %v481
  %v617 = vunpack.c.l.b16 %v482
  %v618 = vunpack.c.l.b16 %v483
  %v619 = vunpack.c.l.b16 %v484
  %v620 = vunpack.c.l.b16 %v485
  %v621 = vunpack.c.l.b16 %v486
  %v622 = vunpack.c.l.b16 %v487
  %v623 = vunpack.c.l.b16 %v488
  %v624 = vunpack.c.l.b16 %v489
  %v625 = vunpack.c.l.b16 %v490
  %v626 = vunpack.c.l.b16 %v491
  %v627 = vunpack.c.l.b16 %v492
  %v628 = vunpack.c.l.b16 %v493
  %v629 = vunpack.c.l.b16 %v494
  %v630 = vunpack.c.l.b16 %v495
  %v631 = vunpack.c.l.b16 %v496
  %v632 = vunpack.c.l.b16 %v497
  %v633 = vunpack.c.l.b16 %v498
  %v634 = vunpack.c.l.b16 %v499
  %v635 = vunpack.c.l.b16 %v500
  %v636 = vunpack.c.l.b16 %v501
  %v637 = vunpack.c.l.b16 %v502
  %v638 = vunpack.c.l.b16 %v503
  %v639 = vunpack.c.l.b16 %v504
  %v640 = vunpack.c.l.b16 %v505
  %v641 = vunpack.c.l.b16 %v506
  %v642 = vunpack.c.l.b16 %v507
  %v643 = vunpack.c.l.b16 %v508
  %v644 = vunpack.c.l.b16 %v509
  %v645 = vunpack.c.l.b16 %v510
  %v646 = vunpack.c.l.b16 %v511
  %v647 = vunpack.c.l.b16 %v512
  %v648 = vunpack.c.l.b16 %v513
  %v649 = vunpack.c.l.b16 %v514
  %v650 = vunpack.c.l.b16 %v515
  %v651 = vunpack.c.l.b16 %v516
  %v652 = vunpack.c.l.b16 %v517
  %v653 = vunpack.c.l.b16 %v518
  %v654 = vunpack.c.l.b16 %v519
  %v655 = vunpack.c.l.b16 %v520
  %v656 = vunpack.c.l.b16 %v521
  %v657 = vunpack.c.l.b16 %v522
  %v658 = vunpack.c.l.b16 %v523
  %v659 = vunpack.c.l.b16 %v524
  %v660 = vunpack.c.l.b16 %v525
  %v661 = vunpack.c.l.b16 %v526
  %v662 = vunpack.c.l.b16 %v527
  %v663 = vunpack.c.l.b16 %v528
  %v664 = vunpack.c.l.b16 %v529
  %v665 = vunpack.c.l.b16 %v530
  %v666 = vunpack.c.l.b16 %v531
  %v667 = vunpack.c.l.b16 %v532
  %v668 = vpack.c.b16 %v605, %v604
  %v669 = vpack.c.b16 %v607, %v606
  %v670 = vpack.c.b16 %v609, %v608
  %v671 = vpack.c.b16 %v611, %v610
  %v672 = vpack.c.b16 %v613, %v612
  %v673 = vpack.c.b16 %v615, %v614
  %v674 = vpack.c.b16 %v617, %v616
  %v675 = vpack.c.b16 %v619, %v618
  %v676 = vpack.c.b16 %v621, %v620
  %v677 = vpack.c.b16 %v623, %v622
  %v678 = vpack.c.b16 %v625, %v624
  %v679 = vpack.c.b16 %v627, %v626
  %v680 = vpack.c.b16 %v629, %v628
  %v681 = vpack.c.b16 %v631, %v630
  %v682 = vpack.c.b16 %v633, %v632
  %v683 = vpack.c.b16 %v635, %v634
  %v684 = vpack.c.b16 %v637, %v636
  %v685 = vpack.c.b16 %v639, %v638
  %v686 = vpack.c.b16 %v641, %v640
  %v687 = vpack.c.b16 %v643, %v642
  %v688 = vpack.c.b16 %v645, %v644
  %v689 = vpack.c.b16 %v647, %v646
  %v690 = vpack.c.b16 %v649, %v648
  %v691 = vpack.c.b16 %v651, %v650
  %v692 = vpack.c.b16 %v653, %v652
  %v693 = vpack.c.b16 %v655, %v654
  %v694 = vpack.c.b16 %v657, %v656
  %v695 = vpack.c.b16 %v659, %v658
  %v696 = vpack.c.b16 %v661, %v660
  %v697 = vpack.c.b16 %v663, %v662
  %v698 = vpack.c.b16 %v665, %v664
  %v699 = vpack.c.b16 %v667, %v666
  %732 = vmatprep.subr.bf16.mxu0 0
  %733 = vmatpush1.bf16.msra.mxu0 %v668
  %734 = vmatprep.subr.bf16.mxu0 0
  %735 = vmatpush1.bf16.msra.mxu0 %v669
  %736 = vmatprep.subr.bf16.mxu0 0
  %737 = vmatpush1.bf16.msra.mxu0 %v670
  %738 = vmatprep.subr.bf16.mxu0 0
  %739 = vmatpush1.bf16.msra.mxu0 %v671
  %740 = vmatprep.subr.bf16.mxu0 0
  %741 = vmatpush1.bf16.msra.mxu0 %v672
  %742 = vmatprep.subr.bf16.mxu0 0
  %743 = vmatpush1.bf16.msra.mxu0 %v673
  %744 = vmatprep.subr.bf16.mxu0 0
  %745 = vmatpush1.bf16.msra.mxu0 %v674
  %746 = vmatprep.subr.bf16.mxu0 0
  %747 = vmatpush1.bf16.msra.mxu0 %v675
  %748 = vmatprep.subr.bf16.mxu0 0
  %749 = vmatpush1.bf16.msra.mxu0 %v676
  %750 = vmatprep.subr.bf16.mxu0 0
  %751 = vmatpush1.bf16.msra.mxu0 %v677
  %752 = vmatprep.subr.bf16.mxu0 0
  %753 = vmatpush1.bf16.msra.mxu0 %v678
  %754 = vmatprep.subr.bf16.mxu0 0
  %755 = vmatpush1.bf16.msra.mxu0 %v679
  %756 = vmatprep.subr.bf16.mxu0 0
  %757 = vmatpush1.bf16.msra.mxu0 %v680
  %758 = vmatprep.subr.bf16.mxu0 0
  %759 = vmatpush1.bf16.msra.mxu0 %v681
  %760 = vmatprep.subr.bf16.mxu0 0
  %761 = vmatpush1.bf16.msra.mxu0 %v682
  %762 = vmatprep.subr.bf16.mxu0 0
  %763 = vmatpush1.bf16.msra.mxu0 %v683
  %764 = vmatprep.mubr.bf16.mxu0 %v438
  %765 = vmatmul.mubr.bf16.gmra.mrb[0].mxu0 %v437
  %v766 = vpop.f32.mrb[0].mxu0
  %v767 = vadd.f32 %v538, %v766
  %v768 = vpop.f32.mrb[0].mxu0
  %v769 = vpop.f32.mrb[0].mxu0
  %v770 = vadd.f32 %v538, %v769
  %v771 = vpop.f32.mrb[0].mxu0
  %772 = vmatprep.mubr.bf16.mxu0 %v442
  %773 = vmatmul.mubr.bf16.gmra.mrb[0].mxu0 %v441
  %v774 = vpop.f32.mrb[0].mxu0
  %v775 = vadd.f32 %v538, %v774
  %v776 = vpop.f32.mrb[0].mxu0
  %v777 = vpop.f32.mrb[0].mxu0
  %v778 = vadd.f32 %v538, %v777
  %v779 = vpop.f32.mrb[0].mxu0
  %780 = vmatprep.mubr.bf16.mxu0 %v446
  %781 = vmatmul.mubr.bf16.gmra.mrb[0].mxu0 %v445
  %v782 = vpop.f32.mrb[0].mxu0
  %v783 = vadd.f32 %v538, %v782
  %v784 = vpop.f32.mrb[0].mxu0
  %v785 = vpop.f32.mrb[0].mxu0
  %v786 = vadd.f32 %v538, %v785
  %v787 = vpop.f32.mrb[0].mxu0
  %788 = vmatprep.mubr.bf16.mxu0 %v450
  %789 = vmatmul.mubr.bf16.gmra.mrb[0].mxu0 %v449
  %v790 = vpop.f32.mrb[0].mxu0
  %v791 = vadd.f32 %v538, %v790
  %v792 = vpop.f32.mrb[0].mxu0
  %v793 = vpop.f32.mrb[0].mxu0
  %v794 = vadd.f32 %v538, %v793
  %v795 = vpop.f32.mrb[0].mxu0
  %796 = vmatprep.mubr.bf16.mxu0 %v454
  %797 = vmatmul.mubr.bf16.gmra.mrb[0].mxu0 %v453
  %v798 = vpop.f32.mrb[0].mxu0
  %v799 = vadd.f32 %v538, %v798
  %v800 = vpop.f32.mrb[0].mxu0
  %v801 = vpop.f32.mrb[0].mxu0
  %v802 = vadd.f32 %v538, %v801
  %v803 = vpop.f32.mrb[0].mxu0
  %804 = vmatprep.mubr.bf16.mxu0 %v458
  %805 = vmatmul.mubr.bf16.gmra.mrb[0].mxu0 %v457
  %v806 = vpop.f32.mrb[0].mxu0
  %v807 = vadd.f32 %v538, %v806
  %v808 = vpop.f32.mrb[0].mxu0
  %v809 = vpop.f32.mrb[0].mxu0
  %v810 = vadd.f32 %v538, %v809
  %v811 = vpop.f32.mrb[0].mxu0
  %812 = vmatprep.mubr.bf16.mxu0 %v462
  %813 = vmatmul.mubr.bf16.gmra.mrb[0].mxu0 %v461
  %v814 = vpop.f32.mrb[0].mxu0
  %v815 = vadd.f32 %v538, %v814
  %v816 = vpop.f32.mrb[0].mxu0
  %v817 = vpop.f32.mrb[0].mxu0
  %v818 = vadd.f32 %v538, %v817
  %v819 = vpop.f32.mrb[0].mxu0
  %820 = vmatprep.mubr.bf16.mxu0 %v466
  %821 = vmatmul.mubr.bf16.gmra.mrb[0].mxu0 %v465
  %v822 = vpop.f32.mrb[0].mxu0
  %v823 = vadd.f32 %v538, %v822
  %v824 = vpop.f32.mrb[0].mxu0
  %v825 = vpop.f32.mrb[0].mxu0
  %v826 = vadd.f32 %v538, %v825
  %v827 = vpop.f32.mrb[0].mxu0
  %828 = vdwg.mxu0
  %829 = vmatprep.subr.bf16.mxu0 0
  %830 = vmatpush1.bf16.msra.mxu0 %v684
  %831 = vmatprep.subr.bf16.mxu0 0
  %832 = vmatpush1.bf16.msra.mxu0 %v685
  %833 = vmatprep.subr.bf16.mxu0 0
  %834 = vmatpush1.bf16.msra.mxu0 %v686
  %835 = vmatprep.subr.bf16.mxu0 0
  %836 = vmatpush1.bf16.msra.mxu0 %v687
  %837 = vmatprep.subr.bf16.mxu0 0
  %838 = vmatpush1.bf16.msra.mxu0 %v688
  %839 = vmatprep.subr.bf16.mxu0 0
  %840 = vmatpush1.bf16.msra.mxu0 %v689
  %841 = vmatprep.subr.bf16.mxu0 0
  %842 = vmatpush1.bf16.msra.mxu0 %v690
  %843 = vmatprep.subr.bf16.mxu0 0
  %844 = vmatpush1.bf16.msra.mxu0 %v691
  %845 = vmatprep.subr.bf16.mxu0 0
  %846 = vmatpush1.bf16.msra.mxu0 %v692
  %847 = vmatprep.subr.bf16.mxu0 0
  %848 = vmatpush1.bf16.msra.mxu0 %v693
  %849 = vmatprep.subr.bf16.mxu0 0
  %850 = vmatpush1.bf16.msra.mxu0 %v694
  %851 = vmatprep.subr.bf16.mxu0 0
  %852 = vmatpush1.bf16.msra.mxu0 %v695
  %853 = vmatprep.subr.bf16.mxu0 0
  %854 = vmatpush1.bf16.msra.mxu0 %v696
  %855 = vmatprep.subr.bf16.mxu0 0
  %856 = vmatpush1.bf16.msra.mxu0 %v697
  %857 = vmatprep.subr.bf16.mxu0 0
  %858 = vmatpush1.bf16.msra.mxu0 %v698
  %859 = vmatprep.subr.bf16.mxu0 0
  %860 = vmatpush1.bf16.msra.mxu0 %v699
  %861 = vmatprep.mubr.bf16.mxu0 %v440
  %862 = vmatmul.mubr.bf16.gmra.mrb[0].mxu0 %v439
  %v863 = vpop.f32.mrb[0].mxu0
  %v864 = vadd.f32 %v767, %v863
  %v865 = vpop.f32.mrb[0].mxu0
  %v866 = vpop.f32.mrb[0].mxu0
  %v867 = vadd.f32 %v770, %v866
  %v868 = vpop.f32.mrb[0].mxu0
  %869 = vmatprep.mubr.bf16.mxu0 %v444
  %870 = vmatmul.mubr.bf16.gmra.mrb[0].mxu0 %v443
  %v871 = vpop.f32.mrb[0].mxu0
  %v872 = vadd.f32 %v775, %v871
  %v873 = vpop.f32.mrb[0].mxu0
  %v874 = vpop.f32.mrb[0].mxu0
  %v875 = vadd.f32 %v778, %v874
  %v876 = vpop.f32.mrb[0].mxu0
  %877 = vmatprep.mubr.bf16.mxu0 %v448
  %878 = vmatmul.mubr.bf16.gmra.mrb[0].mxu0 %v447
  %v879 = vpop.f32.mrb[0].mxu0
  %v880 = vadd.f32 %v783, %v879
  %v881 = vpop.f32.mrb[0].mxu0
  %v882 = vpop.f32.mrb[0].mxu0
  %v883 = vadd.f32 %v786, %v882
  %v884 = vpop.f32.mrb[0].mxu0
  %885 = vmatprep.mubr.bf16.mxu0 %v452
  %886 = vmatmul.mubr.bf16.gmra.mrb[0].mxu0 %v451
  %v887 = vpop.f32.mrb[0].mxu0
  %v888 = vadd.f32 %v791, %v887
  %v889 = vpop.f32.mrb[0].mxu0
  %v890 = vpop.f32.mrb[0].mxu0
  %v891 = vadd.f32 %v794, %v890
  %v892 = vpop.f32.mrb[0].mxu0
  %893 = vmatprep.mubr.bf16.mxu0 %v456
  %894 = vmatmul.mubr.bf16.gmra.mrb[0].mxu0 %v455
  %v895 = vpop.f32.mrb[0].mxu0
  %v896 = vadd.f32 %v799, %v895
  %v897 = vpop.f32.mrb[0].mxu0
  %v898 = vpop.f32.mrb[0].mxu0
  %v899 = vadd.f32 %v802, %v898
  %v900 = vpop.f32.mrb[0].mxu0
  %901 = vmatprep.mubr.bf16.mxu0 %v460
  %902 = vmatmul.mubr.bf16.gmra.mrb[0].mxu0 %v459
  %v903 = vpop.f32.mrb[0].mxu0
  %v904 = vadd.f32 %v807, %v903
  %v905 = vpop.f32.mrb[0].mxu0
  %v906 = vpop.f32.mrb[0].mxu0
  %v907 = vadd.f32 %v810, %v906
  %v908 = vpop.f32.mrb[0].mxu0
  %909 = vmatprep.mubr.bf16.mxu0 %v464
  %910 = vmatmul.mubr.bf16.gmra.mrb[0].mxu0 %v463
  %v911 = vpop.f32.mrb[0].mxu0
  %v912 = vadd.f32 %v815, %v911
  %v913 = vpop.f32.mrb[0].mxu0
  %v914 = vpop.f32.mrb[0].mxu0
  %v915 = vadd.f32 %v818, %v914
  %v916 = vpop.f32.mrb[0].mxu0
  %917 = vmatprep.mubr.bf16.mxu0 %v468
  %918 = vmatmul.mubr.bf16.gmra.mrb[0].mxu0 %v467
  %v919 = vpop.f32.mrb[0].mxu0
  %v920 = vadd.f32 %v823, %v919
  %v921 = vpop.f32.mrb[0].mxu0
  %v922 = vpop.f32.mrb[0].mxu0
  %v923 = vadd.f32 %v826, %v922
  %v924 = vpop.f32.mrb[0].mxu0
  %925 = vdwg.mxu0
  %v926 = vmax.f32 %v864, 0.0
  %v927 = vmax.f32 %v867, 0.0
  %v928 = vmax.f32 %v872, 0.0
  %v929 = vmax.f32 %v875, 0.0
  %v930 = vmax.f32 %v880, 0.0
  %v931 = vmax.f32 %v883, 0.0
  %v932 = vmax.f32 %v888, 0.0
  %v933 = vmax.f32 %v891, 0.0
  %v934 = vmax.f32 %v896, 0.0
  %v935 = vmax.f32 %v899, 0.0
  %v936 = vmax.f32 %v904, 0.0
  %v937 = vmax.f32 %v907, 0.0
  %v938 = vmax.f32 %v912, 0.0
  %v939 = vmax.f32 %v915, 0.0
  %v940 = vmax.f32 %v920, 0.0
  %v941 = vmax.f32 %v923, 0.0
  %v942 = vld [vmem:[%s5] sm:$0x1]
  %s943 = sld [smem:[#allocation2]]
  %v944 = vstv %s943
  %945 = vmatprep.subr.mxu0 0.0
  %946 = vmatpush1.xpose.msra.mxu0 %v926
  %947 = vmatprep.subr.mxu0 0.0
  %948 = vmatpush1.xpose.msra.mxu0 %v927
  %949 = vmatprep.subr.mxu0 0.0
  %950 = vmatpush1.xpose.msra.mxu0 %v928
  %951 = vmatprep.subr.mxu0 0.0
  %952 = vmatpush1.xpose.msra.mxu0 %v929
  %953 = vmatprep.subr.mxu0 0.0
  %954 = vmatpush1.xpose.msra.mxu0 %v930
  %955 = vmatprep.subr.mxu0 0.0
  %956 = vmatpush1.xpose.msra.mxu0 %v931
  %957 = vmatprep.subr.mxu0 0.0
  %958 = vmatpush1.xpose.msra.mxu0 %v932
  %959 = vmatprep.subr.mxu0 0.0
  %960 = vmatpush1.xpose.msra.mxu0 %v933
  %961 = vmatprep.subr.mxu0 0.0
  %962 = vmatpush1.xpose.msra.mxu0 %v934
  %963 = vmatprep.subr.mxu0 0.0
  %964 = vmatpush1.xpose.msra.mxu0 %v935
  %965 = vmatprep.subr.mxu0 0.0
  %966 = vmatpush1.xpose.msra.mxu0 %v936
  %967 = vmatprep.subr.mxu0 0.0
  %968 = vmatpush1.xpose.msra.mxu0 %v937
  %969 = vmatprep.subr.mxu0 0.0
  %970 = vmatpush1.xpose.msra.mxu0 %v938
  %971 = vmatprep.subr.mxu0 0.0
  %972 = vmatpush1.xpose.msra.mxu0 %v939
  %973 = vmatprep.subr.mxu0 0.0
  %974 = vmatpush1.xpose.msra.mxu0 %v940
  %975 = vmatprep.subr.mxu0 0.0
  %976 = vmatpush1.xpose.msra.mxu0 %v941
  %977 = vmatprep.subr.mxu0 0.0
  %978 = vmatpush1.xpose.msra.mxu0 0.0
  %979 = vmatprep.subr.mxu0 0.0
  %980 = vmatpush1.xpose.msra.mxu0 0.0
  %981 = vmatprep.subr.mxu0 0.0
  %982 = vmatpush1.xpose.msra.mxu0 0.0
  %983 = vmatprep.subr.mxu0 0.0
  %984 = vmatpush1.xpose.msra.mxu0 0.0
  %985 = vmatprep.subr.mxu0 0.0
  %986 = vmatpush1.xpose.msra.mxu0 0.0
  %987 = vmatprep.subr.mxu0 0.0
  %988 = vmatpush1.xpose.msra.mxu0 0.0
  %989 = vmatprep.subr.mxu0 0.0
  %990 = vmatpush1.xpose.msra.mxu0 0.0
  %991 = vmatprep.subr.mxu0 0.0
  %992 = vmatpush1.xpose.msra.mxu0 0.0
  %993 = vmatprep.subr.mxu0 0.0
  %994 = vmatpush1.xpose.msra.mxu0 0.0
  %995 = vmatprep.subr.mxu0 0.0
  %996 = vmatpush1.xpose.msra.mxu0 0.0
  %997 = vmatprep.subr.mxu0 0.0
  %998 = vmatpush1.xpose.msra.mxu0 0.0
  %999 = vmatprep.subr.mxu0 0.0
  %1000 = vmatpush1.xpose.msra.mxu0 0.0
  %1001 = vmatprep.subr.mxu0 0.0
  %1002 = vmatpush1.xpose.msra.mxu0 0.0
  %1003 = vmatprep.subr.mxu0 0.0
  %1004 = vmatpush1.xpose.msra.mxu0 0.0
  %1005 = vmatprep.subr.mxu0 0.0
  %1006 = vmatpush1.xpose.msra.mxu0 0.0
  %1007 = vmatprep.subr.mxu0 0.0
  %1008 = vmatpush1.xpose.msra.mxu0 0.0
  %1009 = vmatprep.mubr.f32.mxu0 0.0
  %1010 = vmatmul.mubr.f32.gmra.mrb[0].mxu0 %v942
  %v1011 = vpop.f32.mrb[0].mxu0
  %v1012 = vadd.f32 %v944, %v1011
  %v1013 = vpop.f32.mrb[0].mxu0
  %1014 = vdwg.mxu0
  %1015 = vst [vmem:[%s7] sm:$0x1] %v1012
  // Predicated region
  $region30: #{grapharma_forward.1} parent=0 // pred_check
    _
  $region31: #{grapharma_forward.1} parent=0 // pred_check_branch
    %1017 = sbr.rel (0) target = $region33
  $region32: #{grapharma_forward.1} parent=0 // pred_region
    _
  $region33: #{grapharma_forward.1} parent=0 // pred_fallthru
    _
  // Predicated region
  $region34: #{grapharma_forward.1} parent=0 // pred_check
    _
  $region35: #{grapharma_forward.1} parent=0 // pred_check_branch
    %1019 = sbr.rel (0) target = $region37
  $region36: #{grapharma_forward.1} parent=0 // pred_region
    _
  $region37: #{grapharma_forward.1} parent=0 // pred_fallthru
    _

</llo_original>
